<compile_context>
chip_gen: v6e
topology: v6e:2x2x1
jax: 0.10.0
libtpu: 0.0.40
codegen_flags: <defaults>
</compile_context>

<pallas_src>
import functools

import jax
import jax.numpy as jnp
from jax.experimental import pallas as pl
from jax.experimental.pallas import tpu as pltpu


def _fusion_kernel(x_ref, w1t_ref, b1_ref, w2_ref, b2_ref, out_ref, *, feat_nums):
    # x_ref  : (1, C, S)      concatenated features, channel on sublane, spatial on lane
    # w1t_ref: (C, hidden)    first 1x1 conv weight, pre-transposed in the wrapper
    # b1_ref : (1, hidden)
    # w2_ref : (C, hidden)    second 1x1 conv weight
    # b2_ref : (C, 1)
    # out_ref: (1, C_per, S)  fused output (C_per = C // feat_nums)
    _, C, S = x_ref.shape
    c_per = C // feat_nums

    # ---- global average pool over spatial (lane reduce), f32 accumulation ----
    x = x_ref[0]                                                        # (C, S), input dtype
    gap = jnp.sum(x.astype(jnp.float32), axis=1, keepdims=True) * (1.0 / S)   # (C, 1)

    # ---- tiny squeeze/excite MLP: hidden = relu(W1 @ gap + b1) ----
    # done as broadcast-multiply + cross-sublane reduce (no MXU needed for hidden=4)
    h = jnp.sum(w1t_ref[...].astype(jnp.float32) * gap, axis=0, keepdims=True)      # (1, hidden)
    h = jnp.maximum(h + b1_ref[...].astype(jnp.float32), 0.0)

    # ---- logits = W2 @ hidden + b2 ----
    logits = jnp.sum(w2_ref[...].astype(jnp.float32) * h, axis=1, keepdims=True)    # (C, 1)
    logits = logits + b2_ref[...].astype(jnp.float32)

    # ---- softmax over channels (sublane axis) ----
    m = jnp.max(logits, axis=0, keepdims=True)                          # (1, 1)
    e = jnp.exp(logits - m)                                             # (C, 1)
    weights = e / jnp.sum(e, axis=0, keepdims=True)                     # (C, 1), f32

    # ---- convex (softmax-weighted) fusion of the feat_nums channel groups ----
    # Stream the group slices straight from the ref; weights broadcast along the lane axis.
    acc = x_ref[0, 0:c_per, :].astype(jnp.float32) * weights[0:c_per, :]
    for n in range(1, feat_nums):
        lo = n * c_per
        acc = acc + x_ref[0, lo:lo + c_per, :].astype(jnp.float32) * weights[lo:lo + c_per, :]

    out_ref[0] = acc.astype(out_ref.dtype)


def convex_fusion_forward(xs, w1, b1, w2, b2, feat_nums):
    """xs: tuple of feat_nums arrays, each (B, C_per, H, W) NCHW.
    w1: (hidden, C) first 1x1-conv weight (squeezed); b1: (hidden,)
    w2: (C, hidden) second 1x1-conv weight (squeezed); b2: (C,)
    Returns (B, C_per, H, W)."""
    assert len(xs) == feat_nums, "number of fused features must equal feat_nums"
    B, c_per, H, W = xs[0].shape
    C = c_per * feat_nums
    S = H * W
    hidden = w1.shape[0]

    # Pure reshapes + channel concat: no transposes, no padding, no extra HBM traffic.
    xcat = jnp.concatenate([x.reshape(B, c_per, S) for x in xs], axis=1)   # (B, C, S)
    w1_t = jnp.transpose(w1.reshape(hidden, C))                            # (C, hidden) (tiny)
    w2_m = w2.reshape(C, hidden)                                           # (C, hidden)
    b1_r = b1.reshape(1, hidden)
    b2_r = b2.reshape(C, 1)

    out = pl.pallas_call(
        functools.partial(_fusion_kernel, feat_nums=feat_nums),
        out_shape=jax.ShapeDtypeStruct((B, c_per, S), xcat.dtype),
        grid_spec=pltpu.PrefetchScalarGridSpec(
            num_scalar_prefetch=0,
            grid=(B,),
            in_specs=[
                pl.BlockSpec((1, C, S), lambda b: (b, 0, 0)),
                pl.BlockSpec((C, hidden), lambda b: (0, 0)),
                pl.BlockSpec((1, hidden), lambda b: (0, 0)),
                pl.BlockSpec((C, hidden), lambda b: (0, 0)),
                pl.BlockSpec((C, 1), lambda b: (0, 0)),
            ],
            out_specs=pl.BlockSpec((1, c_per, S), lambda b: (b, 0, 0)),
        ),
        compiler_params=pltpu.CompilerParams(dimension_semantics=("parallel",)),
    )(xcat, w1_t, b1_r, w2_m, b2_r)

    return out.reshape(B, c_per, H, W)


def _reference_forward(xs, w1, b1, w2, b2, feat_nums):
    """Pure-JAX reference matching the PyTorch module (softmax over channel dim)."""
    xcat = jnp.concatenate(xs, axis=1)                       # (B, C, H, W)
    B, C, H, W = xcat.shape
    gap = jnp.mean(xcat, axis=(2, 3))                        # (B, C)  == AdaptiveAvgPool2d(1)
    h = jnp.maximum(gap @ w1.T + b1, 0.0)                    # 1x1 conv + ReLU
    logits = h @ w2.T + b2                                   # 1x1 conv
    weights = jax.nn.softmax(logits, axis=1)                 # nn.Softmax() -> dim=1 on 4-D
    weighted = xcat * weights[:, :, None, None]
    return weighted.reshape(B, feat_nums, C // feat_nums, H, W).sum(axis=1)


if __name__ == "__main__":
    feat_planes, feat_nums, reduction = 64, 2, 16
    B, H, W = 2, 16, 16
    C = feat_planes * feat_nums          # 128
    hidden = feat_planes // reduction    # 4

    key = jax.random.PRNGKey(0)
    k0, k1, kw1, kb1, kw2, kb2 = jax.random.split(key, 6)
    x0 = jax.random.normal(k0, (B, feat_planes, H, W), jnp.float32)
    x1 = jax.random.normal(k1, (B, feat_planes, H, W), jnp.float32)
    w1 = jax.random.normal(kw1, (hidden, C), jnp.float32) * 0.1   # Conv2d(C, hidden, 1) weight
    b1 = jax.random.normal(kb1, (hidden,), jnp.float32) * 0.1
    w2 = jax.random.normal(kw2, (C, hidden), jnp.float32) * 0.1   # Conv2d(hidden, C, 1) weight
    b2 = jax.random.normal(kb2, (C,), jnp.float32) * 0.1

    out = convex_fusion_forward((x0, x1), w1, b1, w2, b2, feat_nums)
    jax.block_until_ready(out)

    ref = _reference_forward((x0, x1), w1, b1, w2, b2, feat_nums)
    assert out.shape == (B, feat_planes, H, W)
    assert jnp.allclose(out, ref, atol=1e-4, rtol=1e-4), float(jnp.max(jnp.abs(out - ref)))

    print("KERNEL_OK")
</pallas_src>

<mosaic_0001>
module attributes {stable_mosaic.version = 11 : i64} {
  func.func @_fusion_kernel(%arg0: i32, %arg1: memref<1x128x256xf32, #tpu.memory_space<vmem>>, %arg2: memref<128x4xf32, #tpu.memory_space<vmem>>, %arg3: memref<1x4xf32, #tpu.memory_space<vmem>>, %arg4: memref<128x4xf32, #tpu.memory_space<vmem>>, %arg5: memref<128x1xf32, #tpu.memory_space<vmem>>, %arg6: memref<1x64x256xf32, #tpu.memory_space<vmem>>) attributes {dimension_semantics = [#tpu.dimension_semantics<parallel>], iteration_bounds = array<i64: 2>, scalar_prefetch = 0 : i64, scratch_operands = 0 : i64, tpu.core_type = #tpu.core_type<tc>, window_params = [{transform_indices = @transform_0, window_bounds = array<i64: 1, 128, 256>}, {pipeline_mode = #tpu.pipeline_mode<synchronous>, transform_indices = @transform_1, window_bounds = array<i64: 128, 4>}, {pipeline_mode = #tpu.pipeline_mode<synchronous>, transform_indices = @transform_2, window_bounds = array<i64: 1, 4>}, {pipeline_mode = #tpu.pipeline_mode<synchronous>, transform_indices = @transform_3, window_bounds = array<i64: 128, 4>}, {pipeline_mode = #tpu.pipeline_mode<synchronous>, transform_indices = @transform_4, window_bounds = array<i64: 128, 1>}, {transform_indices = @transform_5, window_bounds = array<i64: 1, 64, 256>}]} {
    %c0 = arith.constant 0 : index
    %c0_0 = arith.constant 0 : index
    %c0_1 = arith.constant 0 : index
    %0 = vector.load %arg1[%c0, %c0_0, %c0_1] : memref<1x128x256xf32, #tpu.memory_space<vmem>>, vector<1x128x256xf32>
    %1 = vector.shape_cast %0 : vector<1x128x256xf32> to vector<128x256xf32>
    %cst = arith.constant dense<0.000000e+00> : vector<128xf32>
    %2 = vector.multi_reduction <add>, %1, %cst [1] : vector<128x256xf32> to vector<128xf32>
    %3 = vector.shape_cast %2 : vector<128xf32> to vector<128x1xf32>
    %cst_2 = arith.constant 3.906250e-03 : f32
    %4 = vector.broadcast %cst_2 : f32 to vector<128x1xf32>
    %5 = arith.mulf %3, %4 : vector<128x1xf32>
    %c0_3 = arith.constant 0 : index
    %c0_4 = arith.constant 0 : index
    %6 = vector.load %arg2[%c0_3, %c0_4] : memref<128x4xf32, #tpu.memory_space<vmem>>, vector<128x4xf32>
    %7 = vector.broadcast %5 : vector<128x1xf32> to vector<128x4xf32>
    %8 = arith.mulf %6, %7 : vector<128x4xf32>
    %cst_5 = arith.constant dense<0.000000e+00> : vector<4xf32>
    %9 = vector.multi_reduction <add>, %8, %cst_5 [0] : vector<128x4xf32> to vector<4xf32>
    %10 = vector.shape_cast %9 : vector<4xf32> to vector<1x4xf32>
    %c0_6 = arith.constant 0 : index
    %c0_7 = arith.constant 0 : index
    %11 = vector.load %arg3[%c0_6, %c0_7] : memref<1x4xf32, #tpu.memory_space<vmem>>, vector<1x4xf32>
    %12 = arith.addf %10, %11 : vector<1x4xf32>
    %cst_8 = arith.constant 0.000000e+00 : f32
    %13 = vector.broadcast %cst_8 : f32 to vector<1x4xf32>
    %14 = arith.maximumf %12, %13 : vector<1x4xf32>
    %c0_9 = arith.constant 0 : index
    %c0_10 = arith.constant 0 : index
    %15 = vector.load %arg4[%c0_9, %c0_10] : memref<128x4xf32, #tpu.memory_space<vmem>>, vector<128x4xf32>
    %16 = vector.broadcast %14 : vector<1x4xf32> to vector<128x4xf32>
    %17 = arith.mulf %15, %16 : vector<128x4xf32>
    %cst_11 = arith.constant dense<0.000000e+00> : vector<128xf32>
    %18 = vector.multi_reduction <add>, %17, %cst_11 [1] : vector<128x4xf32> to vector<128xf32>
    %19 = vector.shape_cast %18 : vector<128xf32> to vector<128x1xf32>
    %c0_12 = arith.constant 0 : index
    %c0_13 = arith.constant 0 : index
    %20 = vector.load %arg5[%c0_12, %c0_13] : memref<128x1xf32, #tpu.memory_space<vmem>>, vector<128x1xf32>
    %21 = arith.addf %19, %20 : vector<128x1xf32>
    %cst_14 = arith.constant dense<0xFF800000> : vector<1xf32>
    %22 = vector.multi_reduction <maximumf>, %21, %cst_14 [0] : vector<128x1xf32> to vector<1xf32>
    %23 = vector.shape_cast %22 : vector<1xf32> to vector<1x1xf32>
    %24 = vector.broadcast %23 : vector<1x1xf32> to vector<128x1xf32>
    %25 = arith.subf %21, %24 : vector<128x1xf32>
    %26 = math.exp %25 : vector<128x1xf32>
    %cst_15 = arith.constant dense<0.000000e+00> : vector<1xf32>
    %27 = vector.multi_reduction <add>, %26, %cst_15 [0] : vector<128x1xf32> to vector<1xf32>
    %28 = vector.shape_cast %27 : vector<1xf32> to vector<1x1xf32>
    %29 = vector.broadcast %28 : vector<1x1xf32> to vector<128x1xf32>
    %30 = arith.divf %26, %29 : vector<128x1xf32>
    %c0_16 = arith.constant 0 : index
    %c0_17 = arith.constant 0 : index
    %c0_18 = arith.constant 0 : index
    %31 = vector.load %arg1[%c0_16, %c0_17, %c0_18] : memref<1x128x256xf32, #tpu.memory_space<vmem>>, vector<1x64x256xf32>
    %32 = vector.shape_cast %31 : vector<1x64x256xf32> to vector<64x256xf32>
    %33 = vector.extract_strided_slice %30 {offsets = [0, 0], sizes = [64, 1], strides = [1, 1]} : vector<128x1xf32> to vector<64x1xf32>
    %34 = vector.broadcast %33 : vector<64x1xf32> to vector<64x256xf32>
    %35 = arith.mulf %32, %34 : vector<64x256xf32>
    %c0_19 = arith.constant 0 : index
    %c64 = arith.constant 64 : index
    %c0_20 = arith.constant 0 : index
    %36 = vector.load %arg1[%c0_19, %c64, %c0_20] : memref<1x128x256xf32, #tpu.memory_space<vmem>>, vector<1x64x256xf32>
    %37 = vector.shape_cast %36 : vector<1x64x256xf32> to vector<64x256xf32>
    %38 = vector.extract_strided_slice %30 {offsets = [64, 0], sizes = [64, 1], strides = [1, 1]} : vector<128x1xf32> to vector<64x1xf32>
    %39 = vector.broadcast %38 : vector<64x1xf32> to vector<64x256xf32>
    %40 = arith.mulf %37, %39 : vector<64x256xf32>
    %41 = arith.addf %35, %40 : vector<64x256xf32>
    %c0_21 = arith.constant 0 : index
    %c0_22 = arith.constant 0 : index
    %c0_23 = arith.constant 0 : index
    %42 = vector.load %arg6[%c0_21, %c0_22, %c0_23] : memref<1x64x256xf32, #tpu.memory_space<vmem>>, vector<1x64x256xf32>
    %43 = vector.shape_cast %42 : vector<1x64x256xf32> to vector<64x256xf32>
    %44 = vector.shape_cast %41 : vector<64x256xf32> to vector<1x64x256xf32>
    tpu.vector_store %arg6[%c0_21, %c0_22, %c0_23], %44 {strides = array<i32>} : memref<1x64x256xf32, #tpu.memory_space<vmem>>, vector<1x64x256xf32>,
    return
  }
  func.func @transform_0(%arg0: i32) -> (i32, i32, i32) {
    %c0_i32 = arith.constant 0 : i32
    %c0_i32_0 = arith.constant 0 : i32
    %c0_i32_1 = arith.constant 0 : i32
    return %arg0, %c0_i32, %c0_i32_0 : i32, i32, i32
  }
  func.func @transform_1(%arg0: i32) -> (i32, i32) {
    %c0_i32 = arith.constant 0 : i32
    %c0_i32_0 = arith.constant 0 : i32
    %c0_i32_1 = arith.constant 0 : i32
    return %c0_i32, %c0_i32_0 : i32, i32
  }
  func.func @transform_2(%arg0: i32) -> (i32, i32) {
    %c0_i32 = arith.constant 0 : i32
    %c0_i32_0 = arith.constant 0 : i32
    %c0_i32_1 = arith.constant 0 : i32
    return %c0_i32, %c0_i32_0 : i32, i32
  }
  func.func @transform_3(%arg0: i32) -> (i32, i32) {
    %c0_i32 = arith.constant 0 : i32
    %c0_i32_0 = arith.constant 0 : i32
    %c0_i32_1 = arith.constant 0 : i32
    return %c0_i32, %c0_i32_0 : i32, i32
  }
  func.func @transform_4(%arg0: i32) -> (i32, i32) {
    %c0_i32 = arith.constant 0 : i32
    %c0_i32_0 = arith.constant 0 : i32
    %c0_i32_1 = arith.constant 0 : i32
    return %c0_i32, %c0_i32_0 : i32, i32
  }
  func.func @transform_5(%arg0: i32) -> (i32, i32, i32) {
    %c0_i32 = arith.constant 0 : i32
    %c0_i32_0 = arith.constant 0 : i32
    %c0_i32_1 = arith.constant 0 : i32
    return %arg0, %c0_i32, %c0_i32_0 : i32, i32, i32
  }
}

</mosaic_0001>

<llo_original>
// kernel: tpu_custom_call.1
$region0: #{tpu_custom_call.1}
  #allocation0 [shape = 'u32[]', space=smem, size = 0x4, offset = 0x4, fixed_abs, tag = 'smem constant byte address 0x4 - core index']
  #allocation1 [shape = 'u32[144,128]{1,0:T(1,128)}', space=vmem, size = 0x12000, scoped, tag = 'internal scratch']
  %s0 = inlined_call_operand.hbm [shape: f32[2,128,256], index: 0, kind: input, shape index: {}]
  %s1 = inlined_call_operand.vmem [shape: f32[128,4], index: 1, kind: input, shape index: {}]
  %s2 = inlined_call_operand.vmem [shape: f32[1,4], index: 2, kind: input, shape index: {}]
  %s3 = inlined_call_operand.vmem [shape: f32[128,4], index: 3, kind: input, shape index: {}]
  %s4 = inlined_call_operand.vmem [shape: f32[128,1], index: 4, kind: input, shape index: {}]
  %s5 = inlined_call_operand.hbm [shape: f32[2,64,256], index: 5, kind: output, shape index: {}]
  %s6 = sld [smem:[#allocation0]]
  $region57: #{tpu_custom_call.1} parent=0
    _
  %s8 = ssub.s32 1, %s6
  %s9 = scalar_select 0, %s8, %s6
  $region1: #{tpu_custom_call.1} parent=0
    #allocation2 [shape = 'u8[262144]{0}', space=vmem, size = 0x40000, scoped, tag = 'input window, operand 0']
    #allocation3 [shape = 's32[2]{0}', space=sflag, size = 0x8, scoped, tag = 'scoped memory for tpu_custom_call.1']
    #allocation4 [shape = 's32[2]{0}', space=sflag, size = 0x8, scoped, tag = 'scoped memory for tpu_custom_call.1']
    #allocation5 [shape = 'u8[131072]{0}', space=vmem, size = 0x20000, scoped, tag = 'output window, operand 0']
    %10 = vsyncpa [#allocation3], 0
    %s11 = scalar_lea.sflag [#allocation3], 1
    %12 = vsyncpa %s11, 0
    %13 = vsyncpa [#allocation4], 0
    %s14 = scalar_lea.sflag [#allocation4], 1
    %15 = vsyncpa %s14, 0
    loop: start=0, step=1, limit=4
    $region2: #{tpu_custom_call.1} parent=1 // loop_pre_header
      _
    $region3: #{tpu_custom_call.1} parent=1 // loop_header
      %s17 = sphi 0, %s21
      %p18 = scmp.ge.s32.totalorder %s17, 4
      %s27 = sphi 0, %s29
      %s30 = sphi 0, %s27
      %s31 = sphi 0, %s30
      %s47 = sphi 0, %s31
      %s51 = sphi 0, %s51
      %s53 = sphi 0, %s51
      %s54 = sphi 0, %s53
      %s68 = sphi 0, %s54
      %s72 = sphi 0, %s72
      %s74 = sphi 0, %s72
      %s75 = sphi 0, %s74
      %s89 = sphi 0, %s75
      %s93 = sphi 0, %s93
      %s95 = sphi 0, %s93
      %s96 = sphi 0, %s95
      %s110 = sphi 0, %s96
      %s114 = sphi 0, %s114
      %s116 = sphi 0, %s114
      %s117 = sphi 0, %s116
      %s131 = sphi 0, %s117
      %s137 = sphi 0, %s139
      %s140 = sphi 0, %s137
      %s141 = sphi 0, %s140
      %s157 = sphi 0, %s141
    $region4: #{tpu_custom_call.1} parent=1 // loop_header_branch
      %20 = sbr.rel (%p18) target = $region8
    $region5: #{tpu_custom_call.1} parent=1 // loop_body
      %s22 = ssub.s32 %s17, 1
      %s23 = ssub.s32 %s17, 2
      %s24 = sadd.s32 %s17, 1
      %s25 = ssub.s32 %s17, %s24
      %p26 = scmp.eq.s32.totalorder %s25, 0
      %s28 = sadd.s32 %s27, 1
      %s29 = scalar_select %p26, %s27, %s28
      %p32 = pneg %p26
      %p33 = scmp.eq.s32.totalorder %s17, 1
      %p34 = por %p32, %p33
      %p35 = scmp.ne.s32.totalorder %s27, %s30
      %p36 = scmp.eq.s32.totalorder %s17, 0
      %p37 = por %p35, %p36
      %p38 = scmp.ne.s32.totalorder %s27, %s30
      %p39 = scmp.eq.s32.totalorder %s22, 1
      %p40 = por %p38, %p39
      %p41 = scmp.ne.s32.totalorder %s30, %s31
      %p42 = scmp.eq.s32.totalorder %s22, 0
      %p43 = por %p41, %p42
      %p44 = scmp.ne.s32.totalorder %s30, %s31
      %p45 = scmp.eq.s32.totalorder %s23, 1
      %p46 = por %p44, %p45
      %p48 = scmp.ne.s32.totalorder %s31, %s47
      %p49 = scmp.eq.s32.totalorder %s23, 0
      %p50 = por %p48, %p49
      %s52 = sadd.s32 %s51, 1
      %p55 = scmp.eq.s32.totalorder %s17, 1
      %p56 = scmp.ne.s32.totalorder %s51, %s53
      %p57 = scmp.eq.s32.totalorder %s17, 0
      %p58 = por %p56, %p57
      %p59 = scmp.ne.s32.totalorder %s51, %s53
      %p60 = scmp.eq.s32.totalorder %s22, 1
      %p61 = por %p59, %p60
      %p62 = scmp.ne.s32.totalorder %s53, %s54
      %p63 = scmp.eq.s32.totalorder %s22, 0
      %p64 = por %p62, %p63
      %p65 = scmp.ne.s32.totalorder %s53, %s54
      %p66 = scmp.eq.s32.totalorder %s23, 1
      %p67 = por %p65, %p66
      %p69 = scmp.ne.s32.totalorder %s54, %s68
      %p70 = scmp.eq.s32.totalorder %s23, 0
      %p71 = por %p69, %p70
      %s73 = sadd.s32 %s72, 1
      %p76 = scmp.eq.s32.totalorder %s17, 1
      %p77 = scmp.ne.s32.totalorder %s72, %s74
      %p78 = scmp.eq.s32.totalorder %s17, 0
      %p79 = por %p77, %p78
      %p80 = scmp.ne.s32.totalorder %s72, %s74
      %p81 = scmp.eq.s32.totalorder %s22, 1
      %p82 = por %p80, %p81
      %p83 = scmp.ne.s32.totalorder %s74, %s75
      %p84 = scmp.eq.s32.totalorder %s22, 0
      %p85 = por %p83, %p84
      %p86 = scmp.ne.s32.totalorder %s74, %s75
      %p87 = scmp.eq.s32.totalorder %s23, 1
      %p88 = por %p86, %p87
      %p90 = scmp.ne.s32.totalorder %s75, %s89
      %p91 = scmp.eq.s32.totalorder %s23, 0
      %p92 = por %p90, %p91
      %s94 = sadd.s32 %s93, 1
      %p97 = scmp.eq.s32.totalorder %s17, 1
      %p98 = scmp.ne.s32.totalorder %s93, %s95
      %p99 = scmp.eq.s32.totalorder %s17, 0
      %p100 = por %p98, %p99
      %p101 = scmp.ne.s32.totalorder %s93, %s95
      %p102 = scmp.eq.s32.totalorder %s22, 1
      %p103 = por %p101, %p102
      %p104 = scmp.ne.s32.totalorder %s95, %s96
      %p105 = scmp.eq.s32.totalorder %s22, 0
      %p106 = por %p104, %p105
      %p107 = scmp.ne.s32.totalorder %s95, %s96
      %p108 = scmp.eq.s32.totalorder %s23, 1
      %p109 = por %p107, %p108
      %p111 = scmp.ne.s32.totalorder %s96, %s110
      %p112 = scmp.eq.s32.totalorder %s23, 0
      %p113 = por %p111, %p112
      %s115 = sadd.s32 %s114, 1
      %p118 = scmp.eq.s32.totalorder %s17, 1
      %p119 = scmp.ne.s32.totalorder %s114, %s116
      %p120 = scmp.eq.s32.totalorder %s17, 0
      %p121 = por %p119, %p120
      %p122 = scmp.ne.s32.totalorder %s114, %s116
      %p123 = scmp.eq.s32.totalorder %s22, 1
      %p124 = por %p122, %p123
      %p125 = scmp.ne.s32.totalorder %s116, %s117
      %p126 = scmp.eq.s32.totalorder %s22, 0
      %p127 = por %p125, %p126
      %p128 = scmp.ne.s32.totalorder %s116, %s117
      %p129 = scmp.eq.s32.totalorder %s23, 1
      %p130 = por %p128, %p129
      %p132 = scmp.ne.s32.totalorder %s117, %s131
      %p133 = scmp.eq.s32.totalorder %s23, 0
      %p134 = por %p132, %p133
      %s135 = ssub.s32 %s17, %s24
      %p136 = scmp.eq.s32.totalorder %s135, 0
      %s138 = sadd.s32 %s137, 1
      %s139 = scalar_select %p136, %s137, %s138
      %p142 = pneg %p136
      %p143 = scmp.eq.s32.totalorder %s17, 1
      %p144 = por %p142, %p143
      %p145 = scmp.ne.s32.totalorder %s137, %s140
      %p146 = scmp.eq.s32.totalorder %s17, 0
      %p147 = por %p145, %p146
      %p148 = scmp.ne.s32.totalorder %s137, %s140
      %p149 = scmp.eq.s32.totalorder %s22, 1
      %p150 = por %p148, %p149
      %p151 = scmp.ne.s32.totalorder %s140, %s141
      %p152 = scmp.eq.s32.totalorder %s22, 0
      %p153 = por %p151, %p152
      %p154 = scmp.ne.s32.totalorder %s140, %s141
      %p155 = scmp.eq.s32.totalorder %s23, 1
      %p156 = por %p154, %p155
      %p158 = scmp.ne.s32.totalorder %s141, %s157
      %p159 = scmp.eq.s32.totalorder %s23, 0
      %p160 = por %p158, %p159
      %p161 = scmp.le.s32.totalorder 1, %s17
      %p162 = scmp.lt.s32.totalorder %s17, 3
      %p163 = pnand %p161, %p162
      %p164 = pneg %p163
      // Predicated region
      $region9: #{tpu_custom_call.1} parent=5 // pred_check
        _
      $region10: #{tpu_custom_call.1} parent=5 // pred_check_branch
        %166 = sbr.rel (%p163) target = $region12
      $region11: #{tpu_custom_call.1} parent=5 // pred_region
        %s167 = ssub.s32 %s17, 1
        // Predicated region
        $region13: #{tpu_custom_call.1} parent=11 // pred_check
          %p168 = pneg %p64
        $region14: #{tpu_custom_call.1} parent=11 // pred_check_branch
          %170 = sbr.rel (%p168) target = $region16
        $region15: #{tpu_custom_call.1} parent=11 // pred_region
          _
        $region16: #{tpu_custom_call.1} parent=11 // pred_fallthru
          _
        // Predicated region
        $region17: #{tpu_custom_call.1} parent=11 // pred_check
          %p171 = pneg %p85
        $region18: #{tpu_custom_call.1} parent=11 // pred_check_branch
          %173 = sbr.rel (%p171) target = $region20
        $region19: #{tpu_custom_call.1} parent=11 // pred_region
          _
        $region20: #{tpu_custom_call.1} parent=11 // pred_fallthru
          _
        // Predicated region
        $region21: #{tpu_custom_call.1} parent=11 // pred_check
          %p174 = pneg %p106
        $region22: #{tpu_custom_call.1} parent=11 // pred_check_branch
          %176 = sbr.rel (%p174) target = $region24
        $region23: #{tpu_custom_call.1} parent=11 // pred_region
          _
        $region24: #{tpu_custom_call.1} parent=11 // pred_fallthru
          _
        // Predicated region
        $region25: #{tpu_custom_call.1} parent=11 // pred_check
          %p177 = pneg %p127
        $region26: #{tpu_custom_call.1} parent=11 // pred_check_branch
          %179 = sbr.rel (%p177) target = $region28
        $region27: #{tpu_custom_call.1} parent=11 // pred_region
          _
        $region28: #{tpu_custom_call.1} parent=11 // pred_fallthru
          _
      $region12: #{tpu_custom_call.1} parent=5 // pred_fallthru
        _
      %p180 = scmp.lt.s32.totalorder %s17, 2
      // Predicated region
      $region29: #{tpu_custom_call.1} parent=5 // pred_check
        %p181 = pneg %p180
      $region30: #{tpu_custom_call.1} parent=5 // pred_check_branch
        %183 = sbr.rel (%p181) target = $region32
      $region31: #{tpu_custom_call.1} parent=5 // pred_region
        // Predicated region
        $region33: #{tpu_custom_call.1} parent=31 // pred_check
          %p184 = pneg %p37
        $region34: #{tpu_custom_call.1} parent=31 // pred_check_branch
          %186 = sbr.rel (%p184) target = $region36
        $region35: #{tpu_custom_call.1} parent=31 // pred_region
          %s187 = sand.u32 %s27, 1
          %s188 = scalar_lea.sflag [#allocation3], %s187
          %s189 = sand.u32 %s27, 1
          %s190 = smul.addr %s189, 256
          %s191 = scalar_lea.vmem [#allocation2], %s190
          %s193 = ssub.s32 4096, 4096
          %194 = vsyncadd %s188, %s193
          %s195 = smul.addr %s17, 32
          %s196 = smul.addr %s195, 128
          %s197 = scalar_lea.hbm %s0, %s196
          %s198 = sshll.u32 %s191, 4
          %s199 = int_to_ptr.vmem [resolvable:$true] %s198
          %204 = dma.hbm_to_vmem [thread:$0]  %s197, 4096, %s199, %s188, 256, 256, 16
        $region36: #{tpu_custom_call.1} parent=31 // pred_fallthru
          _
      $region32: #{tpu_custom_call.1} parent=5 // pred_fallthru
        _
      %p205 = scmp.le.s32.totalorder 1, %s17
      %p206 = scmp.lt.s32.totalorder %s17, 3
      %p207 = pnand %p205, %p206
      %p208 = pneg %p207
      // Predicated region
      $region37: #{tpu_custom_call.1} parent=5 // pred_check
        _
      $region38: #{tpu_custom_call.1} parent=5 // pred_check_branch
        %210 = sbr.rel (%p207) target = $region40
      $region39: #{tpu_custom_call.1} parent=5 // pred_region
        %s211 = ssub.s32 %s17, 1
        %s212 = sand.u32 %s30, 1
        %s213 = scalar_lea.sflag [#allocation3], %s212
        %s214 = sand.u32 %s30, 1
        %s215 = smul.addr %s214, 256
        %s216 = scalar_lea.vmem [#allocation2], %s215
        // Predicated region
        $region41: #{tpu_custom_call.1} parent=39 // pred_check
          %p217 = pneg %p43
        $region42: #{tpu_custom_call.1} parent=39 // pred_check_branch
          %219 = sbr.rel (%p217) target = $region44
        $region43: #{tpu_custom_call.1} parent=39 // pred_region
          %220 = dma.done %s213, 4096
        $region44: #{tpu_custom_call.1} parent=39 // pred_fallthru
          _
        %s221 = sand.u32 %s30, 1
        %s222 = scalar_lea.sflag [#allocation3], %s221
        %s223 = sand.u32 %s30, 1
        %s224 = smul.addr %s223, 256
        %s225 = scalar_lea.vmem [#allocation2], %s224
        %p226 = pneg %p43
        %p227 = pneg %p40
        %p228 = pneg %p64
        %p229 = pneg %p61
        %p230 = pneg %p85
        %p231 = pneg %p82
        %p232 = pneg %p106
        %p233 = pneg %p103
        %p234 = pneg %p127
        %p235 = pneg %p124
        %p236 = pneg %p153
        %p237 = pneg %p150
        %s238 = sand.u32 %s140, 1
        %s239 = scalar_lea.sflag [#allocation4], %s238
        %s240 = sand.u32 %s140, 1
        %s241 = smul.addr %s240, 128
        %s242 = scalar_lea.vmem [#allocation5], %s241
        %v243 = vld [vmem:[%s216] sm:$0xff]
        %v244 = vld [vmem:[%s216 + $0x8] sm:$0xff]
        %v245 = vld [vmem:[%s216 + $0x10] sm:$0xff]
        %v246 = vld [vmem:[%s216 + $0x18] sm:$0xff]
        %v247 = vld [vmem:[%s216 + $0x20] sm:$0xff]
        %v248 = vld [vmem:[%s216 + $0x28] sm:$0xff]
        %v249 = vld [vmem:[%s216 + $0x30] sm:$0xff]
        %v250 = vld [vmem:[%s216 + $0x38] sm:$0xff]
        %v251 = vld [vmem:[%s216 + $0x40] sm:$0xff]
        %v252 = vld [vmem:[%s216 + $0x48] sm:$0xff]
        %v253 = vld [vmem:[%s216 + $0x50] sm:$0xff]
        %v254 = vld [vmem:[%s216 + $0x58] sm:$0xff]
        %v255 = vld [vmem:[%s216 + $0x60] sm:$0xff]
        %v256 = vld [vmem:[%s216 + $0x68] sm:$0xff]
        %v257 = vld [vmem:[%s216 + $0x70] sm:$0xff]
        %v258 = vld [vmem:[%s216 + $0x78] sm:$0xff]
        %v259 = vld [vmem:[%s216 + $0x80] sm:$0xff]
        %v260 = vld [vmem:[%s216 + $0x88] sm:$0xff]
        %v261 = vld [vmem:[%s216 + $0x90] sm:$0xff]
        %v262 = vld [vmem:[%s216 + $0x98] sm:$0xff]
        %v263 = vld [vmem:[%s216 + $0xa0] sm:$0xff]
        %v264 = vld [vmem:[%s216 + $0xa8] sm:$0xff]
        %v265 = vld [vmem:[%s216 + $0xb0] sm:$0xff]
        %v266 = vld [vmem:[%s216 + $0xb8] sm:$0xff]
        %v267 = vld [vmem:[%s216 + $0xc0] sm:$0xff]
        %v268 = vld [vmem:[%s216 + $0xc8] sm:$0xff]
        %v269 = vld [vmem:[%s216 + $0xd0] sm:$0xff]
        %v270 = vld [vmem:[%s216 + $0xd8] sm:$0xff]
        %v271 = vld [vmem:[%s216 + $0xe0] sm:$0xff]
        %v272 = vld [vmem:[%s216 + $0xe8] sm:$0xff]
        %v273 = vld [vmem:[%s216 + $0xf0] sm:$0xff]
        %v274 = vld [vmem:[%s216 + $0xf8] sm:$0xff]
        %v275 = vadd.f32 %v243, %v244
        %276 = vadd.xlane.f32.xlu0 %v275
        %v277 = vpop.xlane.xlu0 %276
        %v278 = vadd.f32 %v245, %v246
        %279 = vadd.xlane.f32.xlu0 %v278
        %v280 = vpop.xlane.xlu0 %279
        %v281 = vadd.f32 %v247, %v248
        %282 = vadd.xlane.f32.xlu0 %v281
        %v283 = vpop.xlane.xlu0 %282
        %v284 = vadd.f32 %v249, %v250
        %285 = vadd.xlane.f32.xlu0 %v284
        %v286 = vpop.xlane.xlu0 %285
        %v287 = vadd.f32 %v251, %v252
        %288 = vadd.xlane.f32.xlu0 %v287
        %v289 = vpop.xlane.xlu0 %288
        %v290 = vadd.f32 %v253, %v254
        %291 = vadd.xlane.f32.xlu0 %v290
        %v292 = vpop.xlane.xlu0 %291
        %v293 = vadd.f32 %v255, %v256
        %294 = vadd.xlane.f32.xlu0 %v293
        %v295 = vpop.xlane.xlu0 %294
        %v296 = vadd.f32 %v257, %v258
        %297 = vadd.xlane.f32.xlu0 %v296
        %v298 = vpop.xlane.xlu0 %297
        %v299 = vadd.f32 %v259, %v260
        %300 = vadd.xlane.f32.xlu0 %v299
        %v301 = vpop.xlane.xlu0 %300
        %v302 = vadd.f32 %v261, %v262
        %303 = vadd.xlane.f32.xlu0 %v302
        %v304 = vpop.xlane.xlu0 %303
        %v305 = vadd.f32 %v263, %v264
        %306 = vadd.xlane.f32.xlu0 %v305
        %v307 = vpop.xlane.xlu0 %306
        %v308 = vadd.f32 %v265, %v266
        %309 = vadd.xlane.f32.xlu0 %v308
        %v310 = vpop.xlane.xlu0 %309
        %v311 = vadd.f32 %v267, %v268
        %312 = vadd.xlane.f32.xlu0 %v311
        %v313 = vpop.xlane.xlu0 %312
        %v314 = vadd.f32 %v269, %v270
        %315 = vadd.xlane.f32.xlu0 %v314
        %v316 = vpop.xlane.xlu0 %315
        %v317 = vadd.f32 %v271, %v272
        %318 = vadd.xlane.f32.xlu0 %v317
        %v319 = vpop.xlane.xlu0 %318
        %v320 = vadd.f32 %v273, %v274
        %321 = vadd.xlane.f32.xlu0 %v320
        %v322 = vpop.xlane.xlu0 %321
        %v323 = vmul.f32 %v277, 0.00390625
        %v324 = vmul.f32 %v280, 0.00390625
        %v325 = vmul.f32 %v283, 0.00390625
        %v326 = vmul.f32 %v286, 0.00390625
        %v327 = vmul.f32 %v289, 0.00390625
        %v328 = vmul.f32 %v292, 0.00390625
        %v329 = vmul.f32 %v295, 0.00390625
        %v330 = vmul.f32 %v298, 0.00390625
        %v331 = vmul.f32 %v301, 0.00390625
        %v332 = vmul.f32 %v304, 0.00390625
        %v333 = vmul.f32 %v307, 0.00390625
        %v334 = vmul.f32 %v310, 0.00390625
        %v335 = vmul.f32 %v313, 0.00390625
        %v336 = vmul.f32 %v316, 0.00390625
        %v337 = vmul.f32 %v319, 0.00390625
        %v338 = vmul.f32 %v322, 0.00390625
        %v339 = vld [vmem:[%s1] sm:$0xff]
        %v340 = vld [vmem:[%s1 + $0x8] sm:$0xff]
        %v341 = vld [vmem:[%s1 + $0x10] sm:$0xff]
        %v342 = vld [vmem:[%s1 + $0x18] sm:$0xff]
        %v343 = vld [vmem:[%s1 + $0x20] sm:$0xff]
        %v344 = vld [vmem:[%s1 + $0x28] sm:$0xff]
        %v345 = vld [vmem:[%s1 + $0x30] sm:$0xff]
        %v346 = vld [vmem:[%s1 + $0x38] sm:$0xff]
        %v347 = vld [vmem:[%s1 + $0x40] sm:$0xff]
        %v348 = vld [vmem:[%s1 + $0x48] sm:$0xff]
        %v349 = vld [vmem:[%s1 + $0x50] sm:$0xff]
        %v350 = vld [vmem:[%s1 + $0x58] sm:$0xff]
        %v351 = vld [vmem:[%s1 + $0x60] sm:$0xff]
        %v352 = vld [vmem:[%s1 + $0x68] sm:$0xff]
        %v353 = vld [vmem:[%s1 + $0x70] sm:$0xff]
        %v354 = vld [vmem:[%s1 + $0x78] sm:$0xff]
        %v355 = vmul.f32 %v339, %v323
        %v356 = vmul.f32 %v340, %v324
        %v357 = vmul.f32 %v341, %v325
        %v358 = vmul.f32 %v342, %v326
        %v359 = vmul.f32 %v343, %v327
        %v360 = vmul.f32 %v344, %v328
        %v361 = vmul.f32 %v345, %v329
        %v362 = vmul.f32 %v346, %v330
        %v363 = vmul.f32 %v347, %v331
        %v364 = vmul.f32 %v348, %v332
        %v365 = vmul.f32 %v349, %v333
        %v366 = vmul.f32 %v350, %v334
        %v367 = vmul.f32 %v351, %v335
        %v368 = vmul.f32 %v352, %v336
        %v369 = vmul.f32 %v353, %v337
        %v370 = vmul.f32 %v354, %v338
        %vm371 = vcmask 31744
        %v372 = vsel %vm371, %v355, 0.0
        %v373 = vsel %vm371, %v356, 0.0
        %v374 = vadd.f32 %v372, %v373
        %v375 = vsel %vm371, %v357, 0.0
        %v376 = vadd.f32 %v374, %v375
        %v377 = vsel %vm371, %v358, 0.0
        %v378 = vadd.f32 %v376, %v377
        %v379 = vsel %vm371, %v359, 0.0
        %v380 = vadd.f32 %v378, %v379
        %v381 = vsel %vm371, %v360, 0.0
        %v382 = vadd.f32 %v380, %v381
        %v383 = vsel %vm371, %v361, 0.0
        %v384 = vadd.f32 %v382, %v383
        %v385 = vsel %vm371, %v362, 0.0
        %v386 = vadd.f32 %v384, %v385
        %v387 = vsel %vm371, %v363, 0.0
        %v388 = vadd.f32 %v386, %v387
        %v389 = vsel %vm371, %v364, 0.0
        %v390 = vadd.f32 %v388, %v389
        %v391 = vsel %vm371, %v365, 0.0
        %v392 = vadd.f32 %v390, %v391
        %v393 = vsel %vm371, %v366, 0.0
        %v394 = vadd.f32 %v392, %v393
        %v395 = vsel %vm371, %v367, 0.0
        %v396 = vadd.f32 %v394, %v395
        %v397 = vsel %vm371, %v368, 0.0
        %v398 = vadd.f32 %v396, %v397
        %v399 = vsel %vm371, %v369, 0.0
        %v400 = vadd.f32 %v398, %v399
        %v401 = vsel %vm371, %v370, 0.0
        %v402 = vadd.f32 %v400, %v401
        %v403 = vrot.slane %v402, 4
        %v404 = vadd.f32 %v402, %v403
        %v405 = vrot.slane %v404, 2
        %v406 = vadd.f32 %v404, %v405
        %v407 = vrot.slane %v406, 1
        %v408 = vadd.f32 %v406, %v407
        %v409 = vld [vmem:[%s2] sm:$0x1]
        %v410 = vadd.f32 %v408, %v409
        %v411 = vmax.f32 %v410, 0.0
        %v412 = vld [vmem:[%s3] sm:$0xff]
        %v413 = vld [vmem:[%s3 + $0x8] sm:$0xff]
        %v414 = vld [vmem:[%s3 + $0x10] sm:$0xff]
        %v415 = vld [vmem:[%s3 + $0x18] sm:$0xff]
        %v416 = vld [vmem:[%s3 + $0x20] sm:$0xff]
        %v417 = vld [vmem:[%s3 + $0x28] sm:$0xff]
        %v418 = vld [vmem:[%s3 + $0x30] sm:$0xff]
        %v419 = vld [vmem:[%s3 + $0x38] sm:$0xff]
        %v420 = vld [vmem:[%s3 + $0x40] sm:$0xff]
        %v421 = vld [vmem:[%s3 + $0x48] sm:$0xff]
        %v422 = vld [vmem:[%s3 + $0x50] sm:$0xff]
        %v423 = vld [vmem:[%s3 + $0x58] sm:$0xff]
        %v424 = vld [vmem:[%s3 + $0x60] sm:$0xff]
        %v425 = vld [vmem:[%s3 + $0x68] sm:$0xff]
        %v426 = vld [vmem:[%s3 + $0x70] sm:$0xff]
        %v427 = vld [vmem:[%s3 + $0x78] sm:$0xff]
        %v428 = vlaneseq
        %v429 = vshrl.u32 %v428, 7
        %v430 = vsub.s32 0, %v429
        %v431 = vrot.slane %v411, %v430
        %v432 = vmul.f32 %v412, %v431
        %v433 = vmul.f32 %v413, %v431
        %v434 = vmul.f32 %v414, %v431
        %v435 = vmul.f32 %v415, %v431
        %v436 = vmul.f32 %v416, %v431
        %v437 = vmul.f32 %v417, %v431
        %v438 = vmul.f32 %v418, %v431
        %v439 = vmul.f32 %v419, %v431
        %v440 = vmul.f32 %v420, %v431
        %v441 = vmul.f32 %v421, %v431
        %v442 = vmul.f32 %v422, %v431
        %v443 = vmul.f32 %v423, %v431
        %v444 = vmul.f32 %v424, %v431
        %v445 = vmul.f32 %v425, %v431
        %v446 = vmul.f32 %v426, %v431
        %v447 = vmul.f32 %v427, %v431
        %v448 = vsel %vm371, %v432, 0.0
        %449 = vadd.xlane.f32.xlu0 %v448
        %v450 = vpop.xlane.xlu0 %449
        %v451 = vsel %vm371, %v433, 0.0
        %452 = vadd.xlane.f32.xlu0 %v451
        %v453 = vpop.xlane.xlu0 %452
        %v454 = vsel %vm371, %v434, 0.0
        %455 = vadd.xlane.f32.xlu0 %v454
        %v456 = vpop.xlane.xlu0 %455
        %v457 = vsel %vm371, %v435, 0.0
        %458 = vadd.xlane.f32.xlu0 %v457
        %v459 = vpop.xlane.xlu0 %458
        %v460 = vsel %vm371, %v436, 0.0
        %461 = vadd.xlane.f32.xlu0 %v460
        %v462 = vpop.xlane.xlu0 %461
        %v463 = vsel %vm371, %v437, 0.0
        %464 = vadd.xlane.f32.xlu0 %v463
        %v465 = vpop.xlane.xlu0 %464
        %v466 = vsel %vm371, %v438, 0.0
        %467 = vadd.xlane.f32.xlu0 %v466
        %v468 = vpop.xlane.xlu0 %467
        %v469 = vsel %vm371, %v439, 0.0
        %470 = vadd.xlane.f32.xlu0 %v469
        %v471 = vpop.xlane.xlu0 %470
        %v472 = vsel %vm371, %v440, 0.0
        %473 = vadd.xlane.f32.xlu0 %v472
        %v474 = vpop.xlane.xlu0 %473
        %v475 = vsel %vm371, %v441, 0.0
        %476 = vadd.xlane.f32.xlu0 %v475
        %v477 = vpop.xlane.xlu0 %476
        %v478 = vsel %vm371, %v442, 0.0
        %479 = vadd.xlane.f32.xlu0 %v478
        %v480 = vpop.xlane.xlu0 %479
        %v481 = vsel %vm371, %v443, 0.0
        %482 = vadd.xlane.f32.xlu0 %v481
        %v483 = vpop.xlane.xlu0 %482
        %v484 = vsel %vm371, %v444, 0.0
        %485 = vadd.xlane.f32.xlu0 %v484
        %v486 = vpop.xlane.xlu0 %485
        %v487 = vsel %vm371, %v445, 0.0
        %488 = vadd.xlane.f32.xlu0 %v487
        %v489 = vpop.xlane.xlu0 %488
        %v490 = vsel %vm371, %v446, 0.0
        %491 = vadd.xlane.f32.xlu0 %v490
        %v492 = vpop.xlane.xlu0 %491
        %v493 = vsel %vm371, %v447, 0.0
        %494 = vadd.xlane.f32.xlu0 %v493
        %v495 = vpop.xlane.xlu0 %494
        %v496 = vld [vmem:[%s4] sm:$0xff]
        %v497 = vld [vmem:[%s4 + $0x8] sm:$0xff]
        %v498 = vld [vmem:[%s4 + $0x10] sm:$0xff]
        %v499 = vld [vmem:[%s4 + $0x18] sm:$0xff]
        %v500 = vld [vmem:[%s4 + $0x20] sm:$0xff]
        %v501 = vld [vmem:[%s4 + $0x28] sm:$0xff]
        %v502 = vld [vmem:[%s4 + $0x30] sm:$0xff]
        %v503 = vld [vmem:[%s4 + $0x38] sm:$0xff]
        %v504 = vld [vmem:[%s4 + $0x40] sm:$0xff]
        %v505 = vld [vmem:[%s4 + $0x48] sm:$0xff]
        %v506 = vld [vmem:[%s4 + $0x50] sm:$0xff]
        %v507 = vld [vmem:[%s4 + $0x58] sm:$0xff]
        %v508 = vld [vmem:[%s4 + $0x60] sm:$0xff]
        %v509 = vld [vmem:[%s4 + $0x68] sm:$0xff]
        %v510 = vld [vmem:[%s4 + $0x70] sm:$0xff]
        %v511 = vld [vmem:[%s4 + $0x78] sm:$0xff]
        %v512 = vadd.f32 %v450, %v496
        %v513 = vadd.f32 %v453, %v497
        %v514 = vadd.f32 %v456, %v498
        %v515 = vadd.f32 %v459, %v499
        %v516 = vadd.f32 %v462, %v500
        %v517 = vadd.f32 %v465, %v501
        %v518 = vadd.f32 %v468, %v502
        %v519 = vadd.f32 %v471, %v503
        %v520 = vadd.f32 %v474, %v504
        %v521 = vadd.f32 %v477, %v505
        %v522 = vadd.f32 %v480, %v506
        %v523 = vadd.f32 %v483, %v507
        %v524 = vadd.f32 %v486, %v508
        %v525 = vadd.f32 %v489, %v509
        %v526 = vadd.f32 %v492, %v510
        %v527 = vadd.f32 %v495, %v511
        %vm528 = vcmask 7168
        %v529 = vsel %vm528, %v512, -inf
        %v530 = vsel %vm528, %v513, -inf
        %v531 = vsel %vm528, %v514, -inf
        %v532 = vsel %vm528, %v515, -inf
        %v533 = vsel %vm528, %v516, -inf
        %v534 = vmax.f32 %v529, %v533
        %v535 = vsel %vm528, %v517, -inf
        %v536 = vmax.f32 %v530, %v535
        %v537 = vsel %vm528, %v518, -inf
        %v538 = vmax.f32 %v531, %v537
        %v539 = vsel %vm528, %v519, -inf
        %v540 = vmax.f32 %v532, %v539
        %v541 = vsel %vm528, %v520, -inf
        %v542 = vmax.f32 %v534, %v541
        %v543 = vsel %vm528, %v521, -inf
        %v544 = vmax.f32 %v536, %v543
        %v545 = vsel %vm528, %v522, -inf
        %v546 = vmax.f32 %v538, %v545
        %v547 = vsel %vm528, %v523, -inf
        %v548 = vmax.f32 %v540, %v547
        %v549 = vsel %vm528, %v524, -inf
        %v550 = vmax.f32 %v542, %v549
        %v551 = vsel %vm528, %v525, -inf
        %v552 = vmax.f32 %v544, %v551
        %v553 = vsel %vm528, %v526, -inf
        %v554 = vmax.f32 %v546, %v553
        %v555 = vsel %vm528, %v527, -inf
        %v556 = vmax.f32 %v548, %v555
        %v557 = vmax.f32 %v550, %v552
        %v558 = vmax.f32 %v554, %v556
        %v559 = vmax.f32 %v557, %v558
        %v560 = vrot.slane %v559, 4
        %v561 = vmax.f32 %v559, %v560
        %v562 = vrot.slane %v561, 2
        %v563 = vmax.f32 %v561, %v562
        %v564 = vrot.slane %v563, 1
        %v565 = vmax.f32 %v563, %v564
        %v566 = vsub.f32 %v512, %v565
        %v567 = vsub.f32 %v513, %v565
        %v568 = vsub.f32 %v514, %v565
        %v569 = vsub.f32 %v515, %v565
        %v570 = vsub.f32 %v516, %v565
        %v571 = vsub.f32 %v517, %v565
        %v572 = vsub.f32 %v518, %v565
        %v573 = vsub.f32 %v519, %v565
        %v574 = vsub.f32 %v520, %v565
        %v575 = vsub.f32 %v521, %v565
        %v576 = vsub.f32 %v522, %v565
        %v577 = vsub.f32 %v523, %v565
        %v578 = vsub.f32 %v524, %v565
        %v579 = vsub.f32 %v525, %v565
        %v580 = vsub.f32 %v526, %v565
        %v581 = vsub.f32 %v527, %v565
        %v582 = vmul.f32 %v566, 1.442695
        %v583 = vpow.pop %v582
        %v584 = vmul.f32 %v567, 1.442695
        %v585 = vpow.pop %v584
        %v586 = vmul.f32 %v568, 1.442695
        %v587 = vpow.pop %v586
        %v588 = vmul.f32 %v569, 1.442695
        %v589 = vpow.pop %v588
        %v590 = vmul.f32 %v570, 1.442695
        %v591 = vpow.pop %v590
        %v592 = vmul.f32 %v571, 1.442695
        %v593 = vpow.pop %v592
        %v594 = vmul.f32 %v572, 1.442695
        %v595 = vpow.pop %v594
        %v596 = vmul.f32 %v573, 1.442695
        %v597 = vpow.pop %v596
        %v598 = vmul.f32 %v574, 1.442695
        %v599 = vpow.pop %v598
        %v600 = vmul.f32 %v575, 1.442695
        %v601 = vpow.pop %v600
        %v602 = vmul.f32 %v576, 1.442695
        %v603 = vpow.pop %v602
        %v604 = vmul.f32 %v577, 1.442695
        %v605 = vpow.pop %v604
        %v606 = vmul.f32 %v578, 1.442695
        %v607 = vpow.pop %v606
        %v608 = vmul.f32 %v579, 1.442695
        %v609 = vpow.pop %v608
        %v610 = vmul.f32 %v580, 1.442695
        %v611 = vpow.pop %v610
        %v612 = vmul.f32 %v581, 1.442695
        %v613 = vpow.pop %v612
        %v614 = vsel %vm528, %v583, 0.0
        %v615 = vsel %vm528, %v585, 0.0
        %v616 = vadd.f32 %v614, %v615
        %v617 = vsel %vm528, %v587, 0.0
        %v618 = vadd.f32 %v616, %v617
        %v619 = vsel %vm528, %v589, 0.0
        %v620 = vadd.f32 %v618, %v619
        %v621 = vsel %vm528, %v591, 0.0
        %v622 = vadd.f32 %v620, %v621
        %v623 = vsel %vm528, %v593, 0.0
        %v624 = vadd.f32 %v622, %v623
        %v625 = vsel %vm528, %v595, 0.0
        %v626 = vadd.f32 %v624, %v625
        %v627 = vsel %vm528, %v597, 0.0
        %v628 = vadd.f32 %v626, %v627
        %v629 = vsel %vm528, %v599, 0.0
        %v630 = vadd.f32 %v628, %v629
        %v631 = vsel %vm528, %v601, 0.0
        %v632 = vadd.f32 %v630, %v631
        %v633 = vsel %vm528, %v603, 0.0
        %v634 = vadd.f32 %v632, %v633
        %v635 = vsel %vm528, %v605, 0.0
        %v636 = vadd.f32 %v634, %v635
        %v637 = vsel %vm528, %v607, 0.0
        %v638 = vadd.f32 %v636, %v637
        %v639 = vsel %vm528, %v609, 0.0
        %v640 = vadd.f32 %v638, %v639
        %v641 = vsel %vm528, %v611, 0.0
        %v642 = vadd.f32 %v640, %v641
        %v643 = vsel %vm528, %v613, 0.0
        %v644 = vadd.f32 %v642, %v643
        %v645 = vrot.slane %v644, 4
        %v646 = vadd.f32 %v644, %v645
        %v647 = vrot.slane %v646, 2
        %v648 = vadd.f32 %v646, %v647
        %v649 = vrot.slane %v648, 1
        %v650 = vadd.f32 %v648, %v649
        %v651 = vrcp.pop %v650
        %v652 = vmul.f32 %v583, %v651
        %v653 = vmul.f32 %v585, %v651
        %v654 = vmul.f32 %v587, %v651
        %v655 = vmul.f32 %v589, %v651
        %v656 = vmul.f32 %v591, %v651
        %v657 = vmul.f32 %v593, %v651
        %v658 = vmul.f32 %v595, %v651
        %v659 = vmul.f32 %v597, %v651
        %v660 = vmul.f32 %v599, %v651
        %v661 = vmul.f32 %v601, %v651
        %v662 = vmul.f32 %v603, %v651
        %v663 = vmul.f32 %v605, %v651
        %v664 = vmul.f32 %v607, %v651
        %v665 = vmul.f32 %v609, %v651
        %v666 = vmul.f32 %v611, %v651
        %v667 = vmul.f32 %v613, %v651
        %v668 = vld [vmem:[%s216] sm:$0xff]
        %v669 = vld [vmem:[%s216 + $0x8] sm:$0xff]
        %v670 = vld [vmem:[%s216 + $0x10] sm:$0xff]
        %v671 = vld [vmem:[%s216 + $0x18] sm:$0xff]
        %v672 = vld [vmem:[%s216 + $0x20] sm:$0xff]
        %v673 = vld [vmem:[%s216 + $0x28] sm:$0xff]
        %v674 = vld [vmem:[%s216 + $0x30] sm:$0xff]
        %v675 = vld [vmem:[%s216 + $0x38] sm:$0xff]
        %v676 = vld [vmem:[%s216 + $0x40] sm:$0xff]
        %v677 = vld [vmem:[%s216 + $0x48] sm:$0xff]
        %v678 = vld [vmem:[%s216 + $0x50] sm:$0xff]
        %v679 = vld [vmem:[%s216 + $0x58] sm:$0xff]
        %v680 = vld [vmem:[%s216 + $0x60] sm:$0xff]
        %v681 = vld [vmem:[%s216 + $0x68] sm:$0xff]
        %v682 = vld [vmem:[%s216 + $0x70] sm:$0xff]
        %v683 = vld [vmem:[%s216 + $0x78] sm:$0xff]
        %685 = vset.pattern.permute.xlu0 0
        %686 = vperm.xlu0 %685, %v652
        %v687 = vpop.permute.xlu0 %686
        %690 = vset.pattern.permute.xlu0 0
        %691 = vperm.xlu0 %690, %v653
        %v692 = vpop.permute.xlu0 %691
        %695 = vset.pattern.permute.xlu0 0
        %696 = vperm.xlu0 %695, %v654
        %v697 = vpop.permute.xlu0 %696
        %700 = vset.pattern.permute.xlu0 0
        %701 = vperm.xlu0 %700, %v655
        %v702 = vpop.permute.xlu0 %701
        %705 = vset.pattern.permute.xlu0 0
        %706 = vperm.xlu0 %705, %v656
        %v707 = vpop.permute.xlu0 %706
        %710 = vset.pattern.permute.xlu0 0
        %711 = vperm.xlu0 %710, %v657
        %v712 = vpop.permute.xlu0 %711
        %715 = vset.pattern.permute.xlu0 0
        %716 = vperm.xlu0 %715, %v658
        %v717 = vpop.permute.xlu0 %716
        %720 = vset.pattern.permute.xlu0 0
        %721 = vperm.xlu0 %720, %v659
        %v722 = vpop.permute.xlu0 %721
        %v724 = vmul.f32 %v668, %v687
        %v725 = vmul.f32 %v669, %v687
        %v726 = vmul.f32 %v670, %v692
        %v727 = vmul.f32 %v671, %v692
        %v728 = vmul.f32 %v672, %v697
        %v729 = vmul.f32 %v673, %v697
        %v730 = vmul.f32 %v674, %v702
        %v731 = vmul.f32 %v675, %v702
        %v732 = vmul.f32 %v676, %v707
        %v733 = vmul.f32 %v677, %v707
        %v734 = vmul.f32 %v678, %v712
        %v735 = vmul.f32 %v679, %v712
        %v736 = vmul.f32 %v680, %v717
        %v737 = vmul.f32 %v681, %v717
        %v738 = vmul.f32 %v682, %v722
        %v739 = vmul.f32 %v683, %v722
        %741 = vset.pattern.permute.xlu0 0
        %742 = vperm.xlu0 %741, %v660
        %v743 = vpop.permute.xlu0 %742
        %746 = vset.pattern.permute.xlu0 0
        %747 = vperm.xlu0 %746, %v661
        %v748 = vpop.permute.xlu0 %747
        %751 = vset.pattern.permute.xlu0 0
        %752 = vperm.xlu0 %751, %v662
        %v753 = vpop.permute.xlu0 %752
        %756 = vset.pattern.permute.xlu0 0
        %757 = vperm.xlu0 %756, %v663
        %v758 = vpop.permute.xlu0 %757
        %761 = vset.pattern.permute.xlu0 0
        %762 = vperm.xlu0 %761, %v664
        %v763 = vpop.permute.xlu0 %762
        %766 = vset.pattern.permute.xlu0 0
        %767 = vperm.xlu0 %766, %v665
        %v768 = vpop.permute.xlu0 %767
        %771 = vset.pattern.permute.xlu0 0
        %772 = vperm.xlu0 %771, %v666
        %v773 = vpop.permute.xlu0 %772
        %776 = vset.pattern.permute.xlu0 0
        %777 = vperm.xlu0 %776, %v667
        %v778 = vpop.permute.xlu0 %777
        %v780 = vmul.f32 %v259, %v743
        %v781 = vmul.f32 %v260, %v743
        %v782 = vmul.f32 %v261, %v748
        %v783 = vmul.f32 %v262, %v748
        %v784 = vmul.f32 %v263, %v753
        %v785 = vmul.f32 %v264, %v753
        %v786 = vmul.f32 %v265, %v758
        %v787 = vmul.f32 %v266, %v758
        %v788 = vmul.f32 %v267, %v763
        %v789 = vmul.f32 %v268, %v763
        %v790 = vmul.f32 %v269, %v768
        %v791 = vmul.f32 %v270, %v768
        %v792 = vmul.f32 %v271, %v773
        %v793 = vmul.f32 %v272, %v773
        %v794 = vmul.f32 %v273, %v778
        %v795 = vmul.f32 %v274, %v778
        %v796 = vadd.f32 %v724, %v780
        %v797 = vadd.f32 %v725, %v781
        %v798 = vadd.f32 %v726, %v782
        %v799 = vadd.f32 %v727, %v783
        %v800 = vadd.f32 %v728, %v784
        %v801 = vadd.f32 %v729, %v785
        %v802 = vadd.f32 %v730, %v786
        %v803 = vadd.f32 %v731, %v787
        %v804 = vadd.f32 %v732, %v788
        %v805 = vadd.f32 %v733, %v789
        %v806 = vadd.f32 %v734, %v790
        %v807 = vadd.f32 %v735, %v791
        %v808 = vadd.f32 %v736, %v792
        %v809 = vadd.f32 %v737, %v793
        %v810 = vadd.f32 %v738, %v794
        %v811 = vadd.f32 %v739, %v795
        %812 = vst [vmem:[%s242] sm:$0xff] %v796
        %813 = vst [vmem:[%s242 + $0x8] sm:$0xff] %v797
        %814 = vst [vmem:[%s242 + $0x10] sm:$0xff] %v798
        %815 = vst [vmem:[%s242 + $0x18] sm:$0xff] %v799
        %816 = vst [vmem:[%s242 + $0x20] sm:$0xff] %v800
        %817 = vst [vmem:[%s242 + $0x28] sm:$0xff] %v801
        %818 = vst [vmem:[%s242 + $0x30] sm:$0xff] %v802
        %819 = vst [vmem:[%s242 + $0x38] sm:$0xff] %v803
        %820 = vst [vmem:[%s242 + $0x40] sm:$0xff] %v804
        %821 = vst [vmem:[%s242 + $0x48] sm:$0xff] %v805
        %822 = vst [vmem:[%s242 + $0x50] sm:$0xff] %v806
        %823 = vst [vmem:[%s242 + $0x58] sm:$0xff] %v807
        %824 = vst [vmem:[%s242 + $0x60] sm:$0xff] %v808
        %825 = vst [vmem:[%s242 + $0x68] sm:$0xff] %v809
        %826 = vst [vmem:[%s242 + $0x70] sm:$0xff] %v810
        %827 = vst [vmem:[%s242 + $0x78] sm:$0xff] %v811
        %s828 = sand.u32 %s140, 1
        %s829 = scalar_lea.sflag [#allocation4], %s828
        %s830 = sand.u32 %s140, 1
        %s831 = smul.addr %s830, 128
        %s832 = scalar_lea.vmem [#allocation5], %s831
        // Predicated region
        $region45: #{tpu_custom_call.1} parent=39 // pred_check
          %p833 = pneg %p150
        $region46: #{tpu_custom_call.1} parent=39 // pred_check_branch
          %835 = sbr.rel (%p833) target = $region48
        $region47: #{tpu_custom_call.1} parent=39 // pred_region
          %s837 = ssub.s32 2048, 2048
          %838 = vsyncadd %s829, %s837
          %s839 = smul.addr %s22, 16
          %s840 = smul.addr %s839, 128
          %s841 = scalar_lea.hbm %s5, %s840
          %s842 = sshll.u32 %s832, 4
          %s843 = int_to_ptr.vmem [resolvable:$true] %s842
          %848 = dma.vmem_to_hbm [thread:$0]  %s843, 2048, %s841, %s829, 256, 256, 16
        $region48: #{tpu_custom_call.1} parent=39 // pred_fallthru
          _
      $region40: #{tpu_custom_call.1} parent=5 // pred_fallthru
        _
      %p849 = scmp.le.s32.totalorder 2, %s17
      // Predicated region
      $region49: #{tpu_custom_call.1} parent=5 // pred_check
        %p850 = pneg %p849
      $region50: #{tpu_custom_call.1} parent=5 // pred_check_branch
        %852 = sbr.rel (%p850) target = $region52
      $region51: #{tpu_custom_call.1} parent=5 // pred_region
        %s853 = ssub.s32 %s17, 2
        // Predicated region
        $region53: #{tpu_custom_call.1} parent=51 // pred_check
          %p854 = pneg %p156
        $region54: #{tpu_custom_call.1} parent=51 // pred_check_branch
          %856 = sbr.rel (%p854) target = $region56
        $region55: #{tpu_custom_call.1} parent=51 // pred_region
          %s857 = sand.u32 %s141, 1
          %s858 = scalar_lea.sflag [#allocation4], %s857
          %s859 = sand.u32 %s141, 1
          %s860 = smul.addr %s859, 128
          %s861 = scalar_lea.vmem [#allocation5], %s860
          %862 = dma.done %s858, 2048
        $region56: #{tpu_custom_call.1} parent=51 // pred_fallthru
          _
      $region52: #{tpu_custom_call.1} parent=5 // pred_fallthru
        _
    $region6: #{tpu_custom_call.1} parent=1 // loop_footer
      %s21 = sadd.s32 1, %s17
    $region7: #{tpu_custom_call.1} parent=1 // loop_footer_branch
      %16 = sbr.rel target = $region3
    $region8: #{tpu_custom_call.1} parent=1 // loop_exit
      _
    %863 = vsyncpa [#allocation3], 1
    %s864 = scalar_lea.sflag [#allocation3], 1
    %865 = vsyncpa %s864, 1
    %866 = vsyncpa [#allocation4], 1
    %s867 = scalar_lea.sflag [#allocation4], 1
    %868 = vsyncpa %s867, 1

</llo_original>
